<compile_context>
chip_gen: v6e
topology: v6e:2x2x1
jax: 0.10.0
libtpu: 0.0.40
codegen_flags: <defaults>
</compile_context>

<pallas_src>
import jax
import jax.numpy as jnp
from jax.experimental import pallas as pl
from jax.experimental.pallas import tpu as pltpu

LN_EPS = 1e-5


def _residual_ln_kernel(x_ref, sub_ref, w_ref, b_ref, out_ref):
    # x_ref / sub_ref / out_ref : (TB, F) block, F = n_seq * d_model (lane-dense)
    # w_ref / b_ref             : (1, F) LayerNorm affine params (broadcast over rows)
    x3 = x_ref[...].astype(jnp.float32) + sub_ref[...].astype(jnp.float32)  # residual add
    feat = x3.shape[-1]
    inv_n = 1.0 / feat

    # Fused single-pass moments: both reductions issued together, f32 accumulation.
    s1 = jnp.sum(x3, axis=-1, keepdims=True)
    s2 = jnp.sum(x3 * x3, axis=-1, keepdims=True)
    mu = s1 * inv_n
    # Biased variance (matches PyTorch LayerNorm); clamp guards E[x^2]-mu^2 cancellation.
    var = jnp.maximum(s2 * inv_n - mu * mu, 0.0)
    inv = jax.lax.rsqrt(var + LN_EPS)

    y = (x3 - mu) * inv * w_ref[...] + b_ref[...]
    out_ref[...] = y.astype(out_ref.dtype)


def _choose_block_rows(batch, row_bytes, target_block_bytes=2 << 20):
    """Rows per grid step: ~target-sized blocks, sublane-aligned when batch >= 8."""
    tb = max(1, min(batch, target_block_bytes // max(1, row_bytes)))
    if batch >= 8:
        tb = max(8, (tb // 8) * 8)   # keep second-to-last block dim a multiple of 8
    else:
        tb = batch                   # block equals full batch dim (always legal)
    return tb


def residual_connection(x, sub_layer, ln_weight, ln_bias, *, dropout_rate=0.0,
                        training=False, out_dtype=None):
    """Pallas equivalent of ResidualConnection.forward(x, sub_layer).

    x:         (B, n_seq, d_model)
    sub_layer: callable (B, n_seq, d_model) -> (B, n_seq, d_model), plain JAX glue
    ln_weight, ln_bias: (n_seq, d_model)
    """
    assert x.ndim == 3
    B, S, D = x.shape
    assert ln_weight.shape == (S, D) and ln_bias.shape == (S, D)

    x1 = sub_layer(x)
    # Dropout in eval mode is the identity (nn.Dropout only masks/scales in training).
    # TODO(synk): training-mode dropout would use pltpu.prng_seed / prng_random_bits in-kernel.
    x2 = x1

    # Explicit output dtype (follows promotion of x and sub_layer(x) unless overridden).
    if out_dtype is None:
        out_dtype = jnp.result_type(x.dtype, x2.dtype)

    # ---- lane-dense flattening: (B, S, D) -> (B, F), params -> (1, F) ----
    F = S * D
    xf = x.reshape(B, F)
    sf = x2.reshape(B, F)
    wf = ln_weight.reshape(1, F)
    bf = ln_bias.reshape(1, F)

    itemsize = max(jnp.dtype(x.dtype).itemsize, jnp.dtype(x2.dtype).itemsize)
    tb = _choose_block_rows(B, F * itemsize)

    # Pad batch so tb divides it (padded rows are computed but sliced away; LN of a zero
    # row is finite, so no NaN/Inf leakage).
    Bp = -(-B // tb) * tb
    if Bp != B:
        pad = Bp - B
        xf = jnp.pad(xf, ((0, pad), (0, 0)))
        sf = jnp.pad(sf, ((0, pad), (0, 0)))
    grid = (Bp // tb,)

    # VMEM budget: double-buffered x/sub/out blocks + params (+ headroom).
    in_block_bytes = tb * F * itemsize
    out_block_bytes = tb * F * jnp.dtype(out_dtype).itemsize
    param_bytes = 2 * F * jnp.dtype(ln_weight.dtype).itemsize
    vmem_need = 2 * (2 * in_block_bytes + out_block_bytes + param_bytes) + (2 << 20)
    vmem_limit = int(min(max(vmem_need, 32 << 20), 64 << 20))

    grid_spec = pltpu.PrefetchScalarGridSpec(
        num_scalar_prefetch=0,
        grid=grid,
        in_specs=[
            pl.BlockSpec((tb, F), lambda i: (i, 0)),   # x
            pl.BlockSpec((tb, F), lambda i: (i, 0)),   # sub_layer(x) after (eval) dropout
            pl.BlockSpec((1, F), lambda i: (0, 0)),    # LayerNorm weight (grid-invariant)
            pl.BlockSpec((1, F), lambda i: (0, 0)),    # LayerNorm bias   (grid-invariant)
        ],
        out_specs=pl.BlockSpec((tb, F), lambda i: (i, 0)),
    )

    out = pl.pallas_call(
        _residual_ln_kernel,
        out_shape=jax.ShapeDtypeStruct((Bp, F), out_dtype),
        grid_spec=grid_spec,
        compiler_params=pltpu.CompilerParams(
            dimension_semantics=("parallel",),
            vmem_limit_bytes=vmem_limit,
        ),
    )(xf, sf, wf, bf)

    if Bp != B:
        out = out[:B]
    return out.reshape(B, S, D)


def _reference(x, sub_layer, ln_weight, ln_bias):
    x3 = x + sub_layer(x)
    mu = jnp.mean(x3, axis=(1, 2), keepdims=True)
    var = jnp.mean((x3 - mu) ** 2, axis=(1, 2), keepdims=True)
    return (x3 - mu) / jnp.sqrt(var + LN_EPS) * ln_weight[None] + ln_bias[None]


if __name__ == "__main__":
    B, n_seq, d_model = 2, 8, 32

    key = jax.random.PRNGKey(0)
    k_x, k_w, k_b, k_lw, k_lb = jax.random.split(key, 5)

    x = jax.random.normal(k_x, (B, n_seq, d_model), dtype=jnp.float32)

    # Deterministic sub-layer: a simple linear projection d_model -> d_model (plain JAX glue).
    W = jax.random.normal(k_w, (d_model, d_model), dtype=jnp.float32) * 0.05
    b = jax.random.normal(k_b, (d_model,), dtype=jnp.float32) * 0.05
    sub_layer = lambda t: t @ W + b

    # LayerNorm affine params, shape (n_seq, d_model); random to make the affine path nontrivial.
    ln_weight = 1.0 + 0.1 * jax.random.normal(k_lw, (n_seq, d_model), dtype=jnp.float32)
    ln_bias = 0.1 * jax.random.normal(k_lb, (n_seq, d_model), dtype=jnp.float32)

    out = residual_connection(x, sub_layer, ln_weight, ln_bias, dropout_rate=0.1,
                              training=False)
    out = jax.block_until_ready(out)

    ref = jax.block_until_ready(_reference(x, sub_layer, ln_weight, ln_bias))
    assert out.shape == (B, n_seq, d_model)
    assert jnp.allclose(out, ref, atol=1e-5, rtol=1e-5)

    print("KERNEL_OK")
</pallas_src>

<mosaic_0001>
module attributes {stable_mosaic.version = 11 : i64} {
  func.func @_residual_ln_kernel(%arg0: i32, %arg1: memref<2x256xf32, #tpu.memory_space<vmem>>, %arg2: memref<2x256xf32, #tpu.memory_space<vmem>>, %arg3: memref<1x256xf32, #tpu.memory_space<vmem>>, %arg4: memref<1x256xf32, #tpu.memory_space<vmem>>, %arg5: memref<2x256xf32, #tpu.memory_space<vmem>>) attributes {dimension_semantics = [#tpu.dimension_semantics<parallel>], iteration_bounds = array<i64: 1>, scalar_prefetch = 0 : i64, scratch_operands = 0 : i64, tpu.core_type = #tpu.core_type<tc>, window_params = [{transform_indices = @transform_0, window_bounds = array<i64: 2, 256>}, {transform_indices = @transform_1, window_bounds = array<i64: 2, 256>}, {pipeline_mode = #tpu.pipeline_mode<synchronous>, transform_indices = @transform_2, window_bounds = array<i64: 1, 256>}, {pipeline_mode = #tpu.pipeline_mode<synchronous>, transform_indices = @transform_3, window_bounds = array<i64: 1, 256>}, {transform_indices = @transform_4, window_bounds = array<i64: 2, 256>}]} {
    %c0 = arith.constant 0 : index
    %c0_0 = arith.constant 0 : index
    %0 = vector.load %arg1[%c0, %c0_0] : memref<2x256xf32, #tpu.memory_space<vmem>>, vector<2x256xf32>
    %c0_1 = arith.constant 0 : index
    %c0_2 = arith.constant 0 : index
    %1 = vector.load %arg2[%c0_1, %c0_2] : memref<2x256xf32, #tpu.memory_space<vmem>>, vector<2x256xf32>
    %2 = arith.addf %0, %1 : vector<2x256xf32>
    %cst = arith.constant dense<0.000000e+00> : vector<2xf32>
    %3 = vector.multi_reduction <add>, %2, %cst [1] : vector<2x256xf32> to vector<2xf32>
    %4 = vector.shape_cast %3 : vector<2xf32> to vector<2x1xf32>
    %5 = arith.mulf %2, %2 : vector<2x256xf32>
    %cst_3 = arith.constant dense<0.000000e+00> : vector<2xf32>
    %6 = vector.multi_reduction <add>, %5, %cst_3 [1] : vector<2x256xf32> to vector<2xf32>
    %7 = vector.shape_cast %6 : vector<2xf32> to vector<2x1xf32>
    %cst_4 = arith.constant 3.906250e-03 : f32
    %8 = vector.broadcast %cst_4 : f32 to vector<2x1xf32>
    %9 = arith.mulf %4, %8 : vector<2x1xf32>
    %cst_5 = arith.constant 3.906250e-03 : f32
    %10 = vector.broadcast %cst_5 : f32 to vector<2x1xf32>
    %11 = arith.mulf %7, %10 : vector<2x1xf32>
    %12 = arith.mulf %9, %9 : vector<2x1xf32>
    %13 = arith.subf %11, %12 : vector<2x1xf32>
    %cst_6 = arith.constant 0.000000e+00 : f32
    %14 = vector.broadcast %cst_6 : f32 to vector<2x1xf32>
    %15 = arith.maximumf %13, %14 : vector<2x1xf32>
    %cst_7 = arith.constant 9.99999974E-6 : f32
    %16 = vector.broadcast %cst_7 : f32 to vector<2x1xf32>
    %17 = arith.addf %15, %16 : vector<2x1xf32>
    %18 = math.rsqrt %17 : vector<2x1xf32>
    %19 = vector.broadcast %9 : vector<2x1xf32> to vector<2x256xf32>
    %20 = arith.subf %2, %19 : vector<2x256xf32>
    %21 = vector.broadcast %18 : vector<2x1xf32> to vector<2x256xf32>
    %22 = arith.mulf %20, %21 : vector<2x256xf32>
    %c0_8 = arith.constant 0 : index
    %c0_9 = arith.constant 0 : index
    %23 = vector.load %arg3[%c0_8, %c0_9] : memref<1x256xf32, #tpu.memory_space<vmem>>, vector<1x256xf32>
    %24 = vector.broadcast %23 : vector<1x256xf32> to vector<2x256xf32>
    %25 = arith.mulf %22, %24 : vector<2x256xf32>
    %c0_10 = arith.constant 0 : index
    %c0_11 = arith.constant 0 : index
    %26 = vector.load %arg4[%c0_10, %c0_11] : memref<1x256xf32, #tpu.memory_space<vmem>>, vector<1x256xf32>
    %27 = vector.broadcast %26 : vector<1x256xf32> to vector<2x256xf32>
    %28 = arith.addf %25, %27 : vector<2x256xf32>
    %c0_12 = arith.constant 0 : index
    %c0_13 = arith.constant 0 : index
    %29 = vector.load %arg5[%c0_12, %c0_13] : memref<2x256xf32, #tpu.memory_space<vmem>>, vector<2x256xf32>
    tpu.vector_store %arg5[%c0_12, %c0_13], %28 {strides = array<i32>} : memref<2x256xf32, #tpu.memory_space<vmem>>, vector<2x256xf32>,
    return
  }
  func.func @transform_0(%arg0: i32) -> (i32, i32) {
    %c0_i32 = arith.constant 0 : i32
    %c0_i32_0 = arith.constant 0 : i32
    return %arg0, %c0_i32 : i32, i32
  }
  func.func @transform_1(%arg0: i32) -> (i32, i32) {
    %c0_i32 = arith.constant 0 : i32
    %c0_i32_0 = arith.constant 0 : i32
    return %arg0, %c0_i32 : i32, i32
  }
  func.func @transform_2(%arg0: i32) -> (i32, i32) {
    %c0_i32 = arith.constant 0 : i32
    %c0_i32_0 = arith.constant 0 : i32
    %c0_i32_1 = arith.constant 0 : i32
    return %c0_i32, %c0_i32_0 : i32, i32
  }
  func.func @transform_3(%arg0: i32) -> (i32, i32) {
    %c0_i32 = arith.constant 0 : i32
    %c0_i32_0 = arith.constant 0 : i32
    %c0_i32_1 = arith.constant 0 : i32
    return %c0_i32, %c0_i32_0 : i32, i32
  }
  func.func @transform_4(%arg0: i32) -> (i32, i32) {
    %c0_i32 = arith.constant 0 : i32
    %c0_i32_0 = arith.constant 0 : i32
    return %arg0, %c0_i32 : i32, i32
  }
}

</mosaic_0001>

<llo_original>
// kernel: tpu_custom_call.1
$region0: #{tpu_custom_call.1}
  #allocation0 [shape = 'u32[]', space=smem, size = 0x4, offset = 0x4, fixed_abs, tag = 'smem constant byte address 0x4 - core index']
  #allocation1 [shape = 'u32[144,128]{1,0:T(1,128)}', space=vmem, size = 0x12000, scoped, tag = 'internal scratch']
  %s0 = inlined_call_operand.hbm [shape: f32[2,256], index: 0, kind: input, shape index: {}]
  %s1 = inlined_call_operand.hbm [shape: f32[2,256], index: 1, kind: input, shape index: {}]
  %s2 = inlined_call_operand.vmem [shape: f32[1,256], index: 2, kind: input, shape index: {}]
  %s3 = inlined_call_operand.vmem [shape: f32[1,256], index: 3, kind: input, shape index: {}]
  %s4 = inlined_call_operand.hbm [shape: f32[2,256], index: 4, kind: output, shape index: {}]
  %s5 = sld [smem:[#allocation0]]
  $region34: #{tpu_custom_call.1} parent=0
    _
  %s7 = ssub.s32 1, %s5
  %s8 = scalar_select 0, %s7, %s5
  $region1: #{tpu_custom_call.1} parent=0
    #allocation2 [shape = 'u8[2048]{0}', space=vmem, size = 0x800, scoped, tag = 'input window, operand 0, single buffered']
    #allocation3 [shape = 's32[1]{0}', space=sflag, size = 0x4, scoped, tag = 'scoped memory for tpu_custom_call.1']
    #allocation4 [shape = 's32[1]{0}', space=sflag, size = 0x4, scoped, tag = 'scoped memory for tpu_custom_call.1']
    #allocation5 [shape = 'u8[2048]{0}', space=vmem, size = 0x800, scoped, tag = 'input window, operand 1, single buffered']
    #allocation6 [shape = 's32[1]{0}', space=sflag, size = 0x4, scoped, tag = 'scoped memory for tpu_custom_call.1']
    #allocation7 [shape = 'u8[2048]{0}', space=vmem, size = 0x800, scoped, tag = 'output window, operand 0, single buffered']
    %9 = vsyncpa [#allocation3], 0
    %10 = vsyncpa [#allocation6], 0
    %11 = vsyncpa [#allocation4], 0
    // Predicated region
    $region2: #{tpu_custom_call.1} parent=1 // pred_check
      _
    $region3: #{tpu_custom_call.1} parent=1 // pred_check_branch
      %13 = sbr.rel (0) target = $region5
    $region4: #{tpu_custom_call.1} parent=1 // pred_region
      %s15 = ssub.s32 64, 64
      %16 = vsyncadd [#allocation3], %s15
      %s18 = sshll.u32 [#allocation2], 4
      %s19 = int_to_ptr.vmem [resolvable:$true] %s18
      %21 = dma.hbm_to_vmem [thread:$0]  %s0, 64, %s19, [#allocation3]
    $region5: #{tpu_custom_call.1} parent=1 // pred_fallthru
      _
    // Predicated region
    $region6: #{tpu_custom_call.1} parent=1 // pred_check
      _
    $region7: #{tpu_custom_call.1} parent=1 // pred_check_branch
      %23 = sbr.rel (0) target = $region9
    $region8: #{tpu_custom_call.1} parent=1 // pred_region
      %s25 = ssub.s32 64, 64
      %26 = vsyncadd [#allocation6], %s25
      %s28 = sshll.u32 [#allocation5], 4
      %s29 = int_to_ptr.vmem [resolvable:$true] %s28
      %31 = dma.hbm_to_vmem [thread:$0]  %s1, 64, %s29, [#allocation6]
    $region9: #{tpu_custom_call.1} parent=1 // pred_fallthru
      _
    // Predicated region
    $region10: #{tpu_custom_call.1} parent=1 // pred_check
      _
    $region11: #{tpu_custom_call.1} parent=1 // pred_check_branch
      %33 = sbr.rel (0) target = $region13
    $region12: #{tpu_custom_call.1} parent=1 // pred_region
      _
    $region13: #{tpu_custom_call.1} parent=1 // pred_fallthru
      _
    // Predicated region
    $region14: #{tpu_custom_call.1} parent=1 // pred_check
      _
    $region15: #{tpu_custom_call.1} parent=1 // pred_check_branch
      %35 = sbr.rel (0) target = $region17
    $region16: #{tpu_custom_call.1} parent=1 // pred_region
      _
    $region17: #{tpu_custom_call.1} parent=1 // pred_fallthru
      _
    // Predicated region
    $region18: #{tpu_custom_call.1} parent=1 // pred_check
      _
    $region19: #{tpu_custom_call.1} parent=1 // pred_check_branch
      %37 = sbr.rel (0) target = $region21
    $region20: #{tpu_custom_call.1} parent=1 // pred_region
      %38 = dma.done [#allocation3], 64
    $region21: #{tpu_custom_call.1} parent=1 // pred_fallthru
      _
    // Predicated region
    $region22: #{tpu_custom_call.1} parent=1 // pred_check
      _
    $region23: #{tpu_custom_call.1} parent=1 // pred_check_branch
      %40 = sbr.rel (0) target = $region25
    $region24: #{tpu_custom_call.1} parent=1 // pred_region
      %41 = dma.done [#allocation6], 64
    $region25: #{tpu_custom_call.1} parent=1 // pred_fallthru
      _
    %v42 = vld [vmem:[#allocation2] sm:$0xf]
    %v43 = vld [vmem:[#allocation5] sm:$0xf]
    %v44 = vadd.f32 %v42, %v43
    %v47 = vunpack.c.l.s4 1983009808
    %v48 = vunpack.c.0.s8 %v47
    %v49 = vlaneseq
    %v50 = vshrl.u32 %v49, 7
    %v51 = vsub.s32 %v48, %v50
    %v52 = vrot.slane %v44, %v51
    %v53 = vcombine.high %v52, %v52
    %vm56 = vcmask 1041408
    %v57 = vsel %vm56, %v52, 0.0
    %v58 = vsel %vm56, %v53, 0.0
    %v59 = vadd.f32 %v57, %v58
    %60 = vadd.xlane.f32.xlu0 %v59
    %v61 = vpop.xlane.xlu0 %60
    %v62 = vmul.f32 %v44, %v44
    %v65 = vunpack.c.l.s4 1983009808
    %v66 = vunpack.c.0.s8 %v65
    %v67 = vlaneseq
    %v68 = vshrl.u32 %v67, 7
    %v69 = vsub.s32 %v66, %v68
    %v70 = vrot.slane %v62, %v69
    %v71 = vcombine.high %v70, %v70
    %v74 = vsel %vm56, %v70, 0.0
    %v75 = vsel %vm56, %v71, 0.0
    %v76 = vadd.f32 %v74, %v75
    %77 = vadd.xlane.f32.xlu0 %v76
    %v78 = vpop.xlane.xlu0 %77
    %v79 = vmul.f32 %v61, 0.00390625
    %v80 = vmul.f32 %v78, 0.00390625
    %v81 = vmul.f32 %v79, %v79
    %v82 = vsub.f32 %v80, %v81
    %v83 = vmax.f32 %v82, 0.0
    %v84 = vadd.f32 %v83, 1e-05
    %v85 = vrsqrt.pop %v84
    %v88 = vunpack.c.l.s4 269488144
    %v89 = vunpack.c.0.s8 %v88
    %v90 = vlaneseq
    %v91 = vshrl.u32 %v90, 7
    %v92 = vsub.s32 %v89, %v91
    %v93 = vrot.slane %v79, %v92
    %v95 = vsub.f32 %v44, %v93
    %v98 = vunpack.c.l.s4 269488144
    %v99 = vunpack.c.0.s8 %v98
    %v100 = vlaneseq
    %v101 = vshrl.u32 %v100, 7
    %v102 = vsub.s32 %v99, %v101
    %v103 = vrot.slane %v85, %v102
    %v105 = vmul.f32 %v95, %v103
    %v106 = vld [vmem:[%s2] sm:$0x3]
    %v108 = vlaneseq
    %v109 = vshrl.u32 %v108, 7
    %v110 = vsub.s32 0, %v109
    %v111 = vrot.slane %v106, %v110
    %v112 = vlaneseq
    %v113 = vshrl.u32 %v112, 7
    %v114 = vsub.s32 1, %v113
    %v115 = vrot.slane %v106, %v114
    %v116 = vcombine.low %v111, %v115
    %v118 = vunpack.c.l.s4 1983009808
    %v119 = vunpack.c.0.s8 %v118
    %v120 = vlaneseq
    %v121 = vshrl.u32 %v120, 7
    %v122 = vsub.s32 %v119, %v121
    %v123 = vrot.slane %v116, %v122
    %v125 = vmul.f32 %v105, %v123
    %v126 = vld [vmem:[%s3] sm:$0x3]
    %v128 = vlaneseq
    %v129 = vshrl.u32 %v128, 7
    %v130 = vsub.s32 0, %v129
    %v131 = vrot.slane %v126, %v130
    %v132 = vlaneseq
    %v133 = vshrl.u32 %v132, 7
    %v134 = vsub.s32 1, %v133
    %v135 = vrot.slane %v126, %v134
    %v136 = vcombine.low %v131, %v135
    %v138 = vunpack.c.l.s4 1983009808
    %v139 = vunpack.c.0.s8 %v138
    %v140 = vlaneseq
    %v141 = vshrl.u32 %v140, 7
    %v142 = vsub.s32 %v139, %v141
    %v143 = vrot.slane %v136, %v142
    %v145 = vadd.f32 %v125, %v143
    %146 = vst [vmem:[#allocation7] sm:$0xf] %v145
    // Predicated region
    $region26: #{tpu_custom_call.1} parent=1 // pred_check
      _
    $region27: #{tpu_custom_call.1} parent=1 // pred_check_branch
      %148 = sbr.rel (0) target = $region29
    $region28: #{tpu_custom_call.1} parent=1 // pred_region
      %s150 = ssub.s32 64, 64
      %151 = vsyncadd [#allocation4], %s150
      %s153 = sshll.u32 [#allocation7], 4
      %s154 = int_to_ptr.vmem [resolvable:$true] %s153
      %156 = dma.vmem_to_hbm [thread:$0]  %s154, 64, %s4, [#allocation4]
    $region29: #{tpu_custom_call.1} parent=1 // pred_fallthru
      _
    // Predicated region
    $region30: #{tpu_custom_call.1} parent=1 // pred_check
      _
    $region31: #{tpu_custom_call.1} parent=1 // pred_check_branch
      %158 = sbr.rel (0) target = $region33
    $region32: #{tpu_custom_call.1} parent=1 // pred_region
      %159 = dma.done [#allocation4], 64
    $region33: #{tpu_custom_call.1} parent=1 // pred_fallthru
      _
    %160 = vsyncpa [#allocation3], 1
    %161 = vsyncpa [#allocation6], 1
    %162 = vsyncpa [#allocation4], 1

</llo_original>
